<compile_context>
chip_gen: v7x
topology: tpu7x:2x2x1
jax: 0.10.0
libtpu: 0.0.40
codegen_flags: <defaults>
</compile_context>

<pallas_src>
import jax
import jax.numpy as jnp
from jax import lax
from jax.experimental import pallas as pl
from jax.experimental.pallas import tpu as pltpu


# ---------------------------------------------------------------------------
# Path 1: embedding table resident in VMEM (small / medium tables).
# ---------------------------------------------------------------------------
def _fedrap_resident_kernel(idx_ref, table_ref, w_ref, b_ref, out_ref):
    # idx_ref:   (TB, 1)        int32  VMEM  -- item indices for this batch tile
    # table_ref: (num_items, D) f32    VMEM  -- full embedding table (resident)
    # w_ref:     (1, D)         f32    VMEM  -- Linear weight
    # b_ref:     (1,)           f32    SMEM  -- Linear bias (scalar)
    # out_ref:   (1, TB)        f32    VMEM  -- sigmoid(emb . w + b), lane-dense
    tb = idx_ref.shape[0]
    num_items = table_ref.shape[0]

    idx = idx_ref[...]                                               # (TB, 1)
    # One-hot gather matrix: oh[j, i] = (idx[j] == i).
    item_ids = lax.broadcasted_iota(jnp.int32, (tb, num_items), 1)   # (TB, num_items)
    one_hot = (item_ids == idx).astype(jnp.float32)                  # (TB, num_items)

    # Embedding gather as a legitimate MXU matmul: (TB, num_items) @ (num_items, D).
    emb = jnp.dot(one_hot, table_ref[...],
                  preferred_element_type=jnp.float32)                # (TB, D)

    # Linear(D, 1): VPU multiply + XLU lane reduce (no N=1 MXU matmul).
    pred = jnp.sum(emb * w_ref[...], axis=-1, keepdims=True) + b_ref[0]   # (TB, 1)

    # Lane-dense store: one (1, TB) slab per grid step.
    out_ref[...] = jax.nn.sigmoid(pred).T.astype(out_ref.dtype)


def _fedrap_forward_resident(idx, table, weight, bias, *, batch_tile):
    B = idx.shape[0]
    num_items, D = table.shape

    # TB: multiple of 128 (lane-dense output), capped by batch_tile.
    tb = min(batch_tile, max(128, ((B + 127) // 128) * 128))
    b_pad = ((B + tb - 1) // tb) * tb
    num_tiles = b_pad // tb

    idx_p = jnp.pad(idx, (0, b_pad - B)).reshape(b_pad, 1)           # (B_pad, 1)
    w = weight.reshape(1, D).astype(jnp.float32)
    b = bias.reshape(1).astype(jnp.float32)

    # VMEM budget: resident table (double-buffered by the pipeline machinery),
    # one-hot / emb intermediates and in/out tiles, with headroom.  Capped at
    # 48 MiB so it also fits v7x's 64 MiB physical VMEM.
    table_bytes = num_items * D * 4
    work_bytes = (tb * num_items + tb * D + 8 * tb) * 4
    vmem_limit = int(min(48 * 2**20, max(32 * 2**20, 4 * (table_bytes + work_bytes))))

    out = pl.pallas_call(
        _fedrap_resident_kernel,
        out_shape=jax.ShapeDtypeStruct((num_tiles, tb), jnp.float32),
        grid=(num_tiles,),
        in_specs=[
            pl.BlockSpec((tb, 1), lambda i: (i, 0)),                 # index tile
            pl.BlockSpec((num_items, D), lambda i: (0, 0)),          # resident table
            pl.BlockSpec((1, D), lambda i: (0, 0)),                  # weight (constant)
            pl.BlockSpec(memory_space=pltpu.MemorySpace.SMEM),       # bias (scalar)
        ],
        out_specs=pl.BlockSpec((1, tb), lambda i: (i, 0)),
        compiler_params=pltpu.CompilerParams(
            dimension_semantics=("parallel",),   # batch tiles are independent (megacore)
            vmem_limit_bytes=vmem_limit,
        ),
    )(idx_p, table, w, b)

    return out.reshape(-1)[:B].reshape(B, 1)


# ---------------------------------------------------------------------------
# Path 2 (fallback for large tables): data-dependent per-row HBM gather.
# The table stays in HBM; only the B needed (1, D) rows are DMA'd, with a
# deeper input pipeline to hide the per-row latency.
# ---------------------------------------------------------------------------
def _fedrap_rowgather_kernel(idx_ref, emb_ref, w_ref, b_ref, out_ref):
    del idx_ref  # the gather is expressed by the table BlockSpec's index_map
    emb = emb_ref[...]                                               # (1, D)
    pred = jnp.sum(emb * w_ref[...], axis=-1, keepdims=True) + b_ref[...]
    out_ref[...] = jax.nn.sigmoid(pred).astype(out_ref.dtype)


def _fedrap_forward_rowgather(idx, table, weight, bias):
    B = idx.shape[0]
    num_items, D = table.shape
    w = weight.reshape(1, D).astype(jnp.float32)
    b = bias.reshape(1, 1).astype(jnp.float32)

    grid_spec = pltpu.PrefetchScalarGridSpec(
        num_scalar_prefetch=1,              # idx lands in SMEM, fed to index_maps
        grid=(B,),
        in_specs=[
            # Data-dependent row gather: only row idx[i] is DMA'd per step.
            # Deeper prefetch: each 128-byte row DMA is latency-bound.
            pl.BlockSpec((1, D), lambda i, idx_ref: (idx_ref[i], 0),
                         pipeline_mode=pl.Buffered(4)),
            pl.BlockSpec((1, D), lambda i, idx_ref: (0, 0)),
            pl.BlockSpec((1, 1), lambda i, idx_ref: (0, 0)),
        ],
        out_specs=pl.BlockSpec((1, 1), lambda i, idx_ref: (i, 0)),
    )
    # TODO(synk): a batched manual-DMA gather (pl.ANY table + VMEM((2, TB, D))
    # scratch + DMA semaphores) would amortize per-step overhead far better for
    # huge tables; kept as the simple per-row gather here.
    return pl.pallas_call(
        _fedrap_rowgather_kernel,
        out_shape=jax.ShapeDtypeStruct((B, 1), jnp.float32),
        grid_spec=grid_spec,
        compiler_params=pltpu.CompilerParams(
            dimension_semantics=("parallel",),
            vmem_limit_bytes=64 * 2**20,
        ),
    )(idx, table, w, b)


# ---------------------------------------------------------------------------
# Public wrapper.
# ---------------------------------------------------------------------------
def fedrap_forward(item_indices, item_embedding_table, affine_weight, affine_bias,
                   *, batch_tile=512,
                   resident_table_bytes=4 * 2**20, resident_num_items=4096):
    """FedRAP forward: sigmoid(Linear(Embedding(item_indices)))."""
    num_items, D = item_embedding_table.shape
    idx = jnp.clip(item_indices.astype(jnp.int32), 0, num_items - 1)
    table = item_embedding_table.astype(jnp.float32)

    table_bytes = num_items * D * 4
    if table_bytes <= resident_table_bytes and num_items <= resident_num_items:
        return _fedrap_forward_resident(idx, table, affine_weight, affine_bias,
                                        batch_tile=batch_tile)
    return _fedrap_forward_rowgather(idx, table, affine_weight, affine_bias)


def fedrap_reference(item_indices, table, weight, bias):
    emb = table[item_indices]                                        # (B, D)
    pred = emb @ weight.reshape(1, -1).T + bias.reshape(1, 1)        # (B, 1)
    return jax.nn.sigmoid(pred)


if __name__ == "__main__":
    # Small synthetic config (mirrors args.num_items / args.latent_dim).
    num_items = 64
    latent_dim = 32
    batch = 8

    key = jax.random.PRNGKey(0)
    k_emb, k_w, k_b, k_idx = jax.random.split(key, 4)

    # Deterministic parameter init (shapes as in the module's __init__):
    #   Embedding weight ~ N(0, 1); Linear weight/bias ~ U(-1/sqrt(D), 1/sqrt(D)).
    item_embedding_table = jax.random.normal(k_emb, (num_items, latent_dim), jnp.float32)
    bound = 1.0 / (latent_dim ** 0.5)
    affine_weight = jax.random.uniform(k_w, (1, latent_dim), jnp.float32, -bound, bound)
    affine_bias = jax.random.uniform(k_b, (1,), jnp.float32, -bound, bound)

    item_indices = jax.random.randint(k_idx, (batch,), 0, num_items, jnp.int32)

    rating = fedrap_forward(item_indices, item_embedding_table, affine_weight, affine_bias)
    rating = jax.block_until_ready(rating)

    ref = fedrap_reference(item_indices, item_embedding_table, affine_weight, affine_bias)
    assert rating.shape == (batch, 1)
    assert jnp.allclose(rating, ref, atol=1e-5, rtol=1e-5)

    print("KERNEL_OK")
</pallas_src>

<mosaic_0001>
module attributes {stable_mosaic.version = 11 : i64} {
  func.func @_fedrap_resident_kernel(%arg0: i32, %arg1: memref<128x1xi32, #tpu.memory_space<vmem>>, %arg2: memref<64x32xf32, #tpu.memory_space<vmem>>, %arg3: memref<1x32xf32, #tpu.memory_space<vmem>>, %arg4: memref<1xf32, #tpu.memory_space<smem>>, %arg5: memref<1x128xf32, #tpu.memory_space<vmem>>) attributes {dimension_semantics = [#tpu.dimension_semantics<parallel>], iteration_bounds = array<i64: 1>, scalar_prefetch = 0 : i64, scratch_operands = 0 : i64, tpu.core_type = #tpu.core_type<tc>, window_params = [{transform_indices = @transform_0, window_bounds = array<i64: 128, 1>}, {pipeline_mode = #tpu.pipeline_mode<synchronous>, transform_indices = @transform_1, window_bounds = array<i64: 64, 32>}, {pipeline_mode = #tpu.pipeline_mode<synchronous>, transform_indices = @transform_2, window_bounds = array<i64: 1, 32>}, {transform_indices = @transform_3, window_bounds = array<i64: 1>}, {transform_indices = @transform_4, window_bounds = array<i64: 1, 128>}]} {
    %c0 = arith.constant 0 : index
    %c0_0 = arith.constant 0 : index
    %0 = vector.load %arg1[%c0, %c0_0] : memref<128x1xi32, #tpu.memory_space<vmem>>, vector<128x1xi32>
    %1 = tpu.iota {dimensions = array<i32: 1>} : vector<128x64xi32>
    %2 = vector.broadcast %0 : vector<128x1xi32> to vector<128x64xi32>
    %3 = arith.cmpi eq, %1, %2 : vector<128x64xi32>
    %4 = arith.extui %3 : vector<128x64xi1> to vector<128x64xi32>
    %5 = arith.sitofp %4 : vector<128x64xi32> to vector<128x64xf32>
    %c0_1 = arith.constant 0 : index
    %c0_2 = arith.constant 0 : index
    %6 = vector.load %arg2[%c0_1, %c0_2] : memref<64x32xf32, #tpu.memory_space<vmem>>, vector<64x32xf32>
    %cst = arith.constant dense<0.000000e+00> : vector<128x32xf32>
    %7 = tpu.matmul %5, %6, %cst {dimension_numbers = #tpu.dot_dimension_numbers<[1], [0], [0], [1], [0, 0, 1, 1], [], []>} : vector<128x64xf32>, vector<64x32xf32>, vector<128x32xf32> -> vector<128x32xf32>
    %c0_3 = arith.constant 0 : index
    %c0_4 = arith.constant 0 : index
    %8 = vector.load %arg3[%c0_3, %c0_4] : memref<1x32xf32, #tpu.memory_space<vmem>>, vector<1x32xf32>
    %9 = vector.broadcast %8 : vector<1x32xf32> to vector<128x32xf32>
    %10 = arith.mulf %7, %9 : vector<128x32xf32>
    %cst_5 = arith.constant dense<0.000000e+00> : vector<128xf32>
    %11 = vector.multi_reduction <add>, %10, %cst_5 [1] : vector<128x32xf32> to vector<128xf32>
    %12 = vector.shape_cast %11 : vector<128xf32> to vector<128x1xf32>
    %c0_6 = arith.constant 0 : index
    %13 = memref.load %arg4[%c0_6] : memref<1xf32, #tpu.memory_space<smem>>
    %14 = vector.broadcast %13 : f32 to vector<128x1xf32>
    %15 = arith.addf %12, %14 : vector<128x1xf32>
    %16 = arith.negf %15 : vector<128x1xf32>
    %17 = math.exp %16 : vector<128x1xf32>
    %cst_7 = arith.constant 1.000000e+00 : f32
    %18 = vector.broadcast %cst_7 : f32 to vector<128x1xf32>
    %19 = arith.addf %18, %17 : vector<128x1xf32>
    %20 = arith.divf %18, %19 : vector<128x1xf32>
    %21 = tpu.transpose %20, [1, 0] : vector<128x1xf32> -> vector<1x128xf32>
    %c0_8 = arith.constant 0 : index
    %c0_9 = arith.constant 0 : index
    %22 = vector.load %arg5[%c0_8, %c0_9] : memref<1x128xf32, #tpu.memory_space<vmem>>, vector<1x128xf32>
    tpu.vector_store %arg5[%c0_8, %c0_9], %21 {strides = array<i32>} : memref<1x128xf32, #tpu.memory_space<vmem>>, vector<1x128xf32>,
    return
  }
  func.func @transform_0(%arg0: i32) -> (i32, i32) {
    %c0_i32 = arith.constant 0 : i32
    %c0_i32_0 = arith.constant 0 : i32
    return %arg0, %c0_i32 : i32, i32
  }
  func.func @transform_1(%arg0: i32) -> (i32, i32) {
    %c0_i32 = arith.constant 0 : i32
    %c0_i32_0 = arith.constant 0 : i32
    %c0_i32_1 = arith.constant 0 : i32
    return %c0_i32, %c0_i32_0 : i32, i32
  }
  func.func @transform_2(%arg0: i32) -> (i32, i32) {
    %c0_i32 = arith.constant 0 : i32
    %c0_i32_0 = arith.constant 0 : i32
    %c0_i32_1 = arith.constant 0 : i32
    return %c0_i32, %c0_i32_0 : i32, i32
  }
  func.func @transform_3(%arg0: i32) -> i32 {
    %c0_i32 = arith.constant 0 : i32
    %c0_i32_0 = arith.constant 0 : i32
    return %c0_i32 : i32
  }
  func.func @transform_4(%arg0: i32) -> (i32, i32) {
    %c0_i32 = arith.constant 0 : i32
    %c0_i32_0 = arith.constant 0 : i32
    return %arg0, %c0_i32 : i32, i32
  }
}

</mosaic_0001>

<llo_original>
// kernel: tpu_custom_call.1
$region0: #{tpu_custom_call.1}
  #allocation0 [shape = 'u32[]', space=smem, size = 0x4, offset = 0x4, fixed_abs, tag = 'smem constant byte address 0x4 - core index']
  #allocation1 [shape = 'u32[144,128]{1,0:T(1,128)}', space=vmem, size = 0x12000, scoped, tag = 'internal scratch']
  #allocation2 [shape = 'f32[1]{0:T(128)S(6)}', space=smem, size = 0x200, scoped, tag = 'scoped memory for tpu_custom_call.1']
  %s0 = inlined_call_operand.vmem [shape: s32[128,1], index: 0, kind: input, shape index: {}]
  %s1 = inlined_call_operand.vmem [shape: f32[64,32], index: 1, kind: input, shape index: {}]
  %s2 = inlined_call_operand.vmem [shape: f32[1,32], index: 2, kind: input, shape index: {}]
  %s3 = inlined_call_operand.<no memory space> [shape: f32[1], index: 3, kind: input, shape index: {}]
  %s4 = inlined_call_operand.hbm [shape: f32[1,128], index: 4, kind: output, shape index: {}]
  %s5 = sld [smem:[#allocation0]]
  $region26: #{tpu_custom_call.1} parent=0
    _
  %s7 = ssub.s32 1, %s5
  %s8 = scalar_select 0, %s7, %s5
  %9 = sst [smem:[#allocation2]] %s3
  $region1: #{tpu_custom_call.1} parent=0
    #allocation3 [shape = 'u8[512]{0}', space=vmem, size = 0x400, scoped, tag = 'output window, operand 0, single buffered']
    #allocation4 [shape = 's32[1]{0}', space=sflag, size = 0x4, scoped, tag = 'scoped memory for tpu_custom_call.1']
    %10 = vsyncpa [#allocation4], 0
    // Predicated region
    $region2: #{tpu_custom_call.1} parent=1 // pred_check
      _
    $region3: #{tpu_custom_call.1} parent=1 // pred_check_branch
      %12 = sbr.rel (0) target = $region5
    $region4: #{tpu_custom_call.1} parent=1 // pred_region
      _
    $region5: #{tpu_custom_call.1} parent=1 // pred_fallthru
      _
    // Predicated region
    $region6: #{tpu_custom_call.1} parent=1 // pred_check
      _
    $region7: #{tpu_custom_call.1} parent=1 // pred_check_branch
      %14 = sbr.rel (0) target = $region9
    $region8: #{tpu_custom_call.1} parent=1 // pred_region
      _
    $region9: #{tpu_custom_call.1} parent=1 // pred_fallthru
      _
    // Predicated region
    $region10: #{tpu_custom_call.1} parent=1 // pred_check
      _
    $region11: #{tpu_custom_call.1} parent=1 // pred_check_branch
      %16 = sbr.rel (0) target = $region13
    $region12: #{tpu_custom_call.1} parent=1 // pred_region
      _
    $region13: #{tpu_custom_call.1} parent=1 // pred_fallthru
      _
    // Predicated region
    $region14: #{tpu_custom_call.1} parent=1 // pred_check
      _
    $region15: #{tpu_custom_call.1} parent=1 // pred_check_branch
      %18 = sbr.rel (0) target = $region17
    $region16: #{tpu_custom_call.1} parent=1 // pred_region
      _
    $region17: #{tpu_custom_call.1} parent=1 // pred_fallthru
      _
    %v19 = vld [vmem:[%s0] sm:$0xff]
    %v20 = vld [vmem:[%s0 + $0x8] sm:$0xff]
    %v21 = vld [vmem:[%s0 + $0x10] sm:$0xff]
    %v22 = vld [vmem:[%s0 + $0x18] sm:$0xff]
    %v23 = vld [vmem:[%s0 + $0x20] sm:$0xff]
    %v24 = vld [vmem:[%s0 + $0x28] sm:$0xff]
    %v25 = vld [vmem:[%s0 + $0x30] sm:$0xff]
    %v26 = vld [vmem:[%s0 + $0x38] sm:$0xff]
    %v27 = vld [vmem:[%s0 + $0x40] sm:$0xff]
    %v28 = vld [vmem:[%s0 + $0x48] sm:$0xff]
    %v29 = vld [vmem:[%s0 + $0x50] sm:$0xff]
    %v30 = vld [vmem:[%s0 + $0x58] sm:$0xff]
    %v31 = vld [vmem:[%s0 + $0x60] sm:$0xff]
    %v32 = vld [vmem:[%s0 + $0x68] sm:$0xff]
    %v33 = vld [vmem:[%s0 + $0x70] sm:$0xff]
    %v34 = vld [vmem:[%s0 + $0x78] sm:$0xff]
    %v35 = vlaneseq
    %v36 = vand.u32 %v35, 127
    %37 = vset.pattern.permute.xlu0 0
    %38 = vperm.xlu0 %37, %v19
    %v39 = vpop.permute.xlu0 %38
    %40 = vset.pattern.permute.xlu0 0
    %41 = vperm.xlu0 %40, %v20
    %v42 = vpop.permute.xlu0 %41
    %43 = vset.pattern.permute.xlu0 0
    %44 = vperm.xlu0 %43, %v21
    %v45 = vpop.permute.xlu0 %44
    %46 = vset.pattern.permute.xlu0 0
    %47 = vperm.xlu0 %46, %v22
    %v48 = vpop.permute.xlu0 %47
    %49 = vset.pattern.permute.xlu0 0
    %50 = vperm.xlu0 %49, %v23
    %v51 = vpop.permute.xlu0 %50
    %52 = vset.pattern.permute.xlu0 0
    %53 = vperm.xlu0 %52, %v24
    %v54 = vpop.permute.xlu0 %53
    %55 = vset.pattern.permute.xlu0 0
    %56 = vperm.xlu0 %55, %v25
    %v57 = vpop.permute.xlu0 %56
    %58 = vset.pattern.permute.xlu0 0
    %59 = vperm.xlu0 %58, %v26
    %v60 = vpop.permute.xlu0 %59
    %61 = vset.pattern.permute.xlu0 0
    %62 = vperm.xlu0 %61, %v27
    %v63 = vpop.permute.xlu0 %62
    %64 = vset.pattern.permute.xlu0 0
    %65 = vperm.xlu0 %64, %v28
    %v66 = vpop.permute.xlu0 %65
    %67 = vset.pattern.permute.xlu0 0
    %68 = vperm.xlu0 %67, %v29
    %v69 = vpop.permute.xlu0 %68
    %70 = vset.pattern.permute.xlu0 0
    %71 = vperm.xlu0 %70, %v30
    %v72 = vpop.permute.xlu0 %71
    %73 = vset.pattern.permute.xlu0 0
    %74 = vperm.xlu0 %73, %v31
    %v75 = vpop.permute.xlu0 %74
    %76 = vset.pattern.permute.xlu0 0
    %77 = vperm.xlu0 %76, %v32
    %v78 = vpop.permute.xlu0 %77
    %79 = vset.pattern.permute.xlu0 0
    %80 = vperm.xlu0 %79, %v33
    %v81 = vpop.permute.xlu0 %80
    %82 = vset.pattern.permute.xlu0 0
    %83 = vperm.xlu0 %82, %v34
    %v84 = vpop.permute.xlu0 %83
    %vm85 = vcmp.eq.s32.totalorder %v36, %v39
    %vm86 = vcmp.eq.s32.totalorder %v36, %v42
    %vm87 = vcmp.eq.s32.totalorder %v36, %v45
    %vm88 = vcmp.eq.s32.totalorder %v36, %v48
    %vm89 = vcmp.eq.s32.totalorder %v36, %v51
    %vm90 = vcmp.eq.s32.totalorder %v36, %v54
    %vm91 = vcmp.eq.s32.totalorder %v36, %v57
    %vm92 = vcmp.eq.s32.totalorder %v36, %v60
    %vm93 = vcmp.eq.s32.totalorder %v36, %v63
    %vm94 = vcmp.eq.s32.totalorder %v36, %v66
    %vm95 = vcmp.eq.s32.totalorder %v36, %v69
    %vm96 = vcmp.eq.s32.totalorder %v36, %v72
    %vm97 = vcmp.eq.s32.totalorder %v36, %v75
    %vm98 = vcmp.eq.s32.totalorder %v36, %v78
    %vm99 = vcmp.eq.s32.totalorder %v36, %v81
    %vm100 = vcmp.eq.s32.totalorder %v36, %v84
    %v101 = vsel %vm85, 1, 0
    %v102 = vsel %vm86, 1, 0
    %v103 = vsel %vm87, 1, 0
    %v104 = vsel %vm88, 1, 0
    %v105 = vsel %vm89, 1, 0
    %v106 = vsel %vm90, 1, 0
    %v107 = vsel %vm91, 1, 0
    %v108 = vsel %vm92, 1, 0
    %v109 = vsel %vm93, 1, 0
    %v110 = vsel %vm94, 1, 0
    %v111 = vsel %vm95, 1, 0
    %v112 = vsel %vm96, 1, 0
    %v113 = vsel %vm97, 1, 0
    %v114 = vsel %vm98, 1, 0
    %v115 = vsel %vm99, 1, 0
    %v116 = vsel %vm100, 1, 0
    %v117 = vcvt.s32.f32 %v101
    %v118 = vcvt.s32.f32 %v102
    %v119 = vcvt.s32.f32 %v103
    %v120 = vcvt.s32.f32 %v104
    %v121 = vcvt.s32.f32 %v105
    %v122 = vcvt.s32.f32 %v106
    %v123 = vcvt.s32.f32 %v107
    %v124 = vcvt.s32.f32 %v108
    %v125 = vcvt.s32.f32 %v109
    %v126 = vcvt.s32.f32 %v110
    %v127 = vcvt.s32.f32 %v111
    %v128 = vcvt.s32.f32 %v112
    %v129 = vcvt.s32.f32 %v113
    %v130 = vcvt.s32.f32 %v114
    %v131 = vcvt.s32.f32 %v115
    %v132 = vcvt.s32.f32 %v116
    %v133 = vld [vmem:[%s1] sm:$0xff]
    %v134 = vld [vmem:[%s1 + $0x8] sm:$0xff]
    %v135 = vld [vmem:[%s1 + $0x10] sm:$0xff]
    %v136 = vld [vmem:[%s1 + $0x18] sm:$0xff]
    %v137 = vld [vmem:[%s1 + $0x20] sm:$0xff]
    %v138 = vld [vmem:[%s1 + $0x28] sm:$0xff]
    %v139 = vld [vmem:[%s1 + $0x30] sm:$0xff]
    %v140 = vld [vmem:[%s1 + $0x38] sm:$0xff]
    %vm141 = vcmask 523264
    %v143 = vsel %vm141, %v117, 0
    %v146 = vsel %vm141, %v118, 0
    %v149 = vsel %vm141, %v119, 0
    %v152 = vsel %vm141, %v120, 0
    %v155 = vsel %vm141, %v121, 0
    %v158 = vsel %vm141, %v122, 0
    %v161 = vsel %vm141, %v123, 0
    %v164 = vsel %vm141, %v124, 0
    %v167 = vsel %vm141, %v125, 0
    %v170 = vsel %vm141, %v126, 0
    %v173 = vsel %vm141, %v127, 0
    %v176 = vsel %vm141, %v128, 0
    %v179 = vsel %vm141, %v129, 0
    %v182 = vsel %vm141, %v130, 0
    %v185 = vsel %vm141, %v131, 0
    %v188 = vsel %vm141, %v132, 0
    %190 = vmatprep.subr.mxu0 0.0
    %191 = vmatpush1.msra.mxu0 %v133
    %192 = vmatprep.subr.mxu0 0.0
    %193 = vmatpush1.msra.mxu0 %v134
    %194 = vmatprep.subr.mxu0 0.0
    %195 = vmatpush1.msra.mxu0 %v135
    %196 = vmatprep.subr.mxu0 0.0
    %197 = vmatpush1.msra.mxu0 %v136
    %198 = vmatprep.subr.mxu0 0.0
    %199 = vmatpush1.msra.mxu0 %v137
    %200 = vmatprep.subr.mxu0 0.0
    %201 = vmatpush1.msra.mxu0 %v138
    %202 = vmatprep.subr.mxu0 0.0
    %203 = vmatpush1.msra.mxu0 %v139
    %204 = vmatprep.subr.mxu0 0.0
    %205 = vmatpush1.msra.mxu0 %v140
    %206 = vmatprep.subr.mxu0 0.0
    %207 = vmatpush1.msra.mxu0 0.0
    %208 = vmatprep.subr.mxu0 0.0
    %209 = vmatpush1.msra.mxu0 0.0
    %210 = vmatprep.subr.mxu0 0.0
    %211 = vmatpush1.msra.mxu0 0.0
    %212 = vmatprep.subr.mxu0 0.0
    %213 = vmatpush1.msra.mxu0 0.0
    %214 = vmatprep.subr.mxu0 0.0
    %215 = vmatpush1.msra.mxu0 0.0
    %216 = vmatprep.subr.mxu0 0.0
    %217 = vmatpush1.msra.mxu0 0.0
    %218 = vmatprep.subr.mxu0 0.0
    %219 = vmatpush1.msra.mxu0 0.0
    %220 = vmatprep.subr.mxu0 0.0
    %221 = vmatpush1.msra.mxu0 0.0
    %222 = vmatprep.subr.mxu0 0.0
    %223 = vmatpush1.msra.mxu0 0.0
    %224 = vmatprep.subr.mxu0 0.0
    %225 = vmatpush1.msra.mxu0 0.0
    %226 = vmatprep.subr.mxu0 0.0
    %227 = vmatpush1.msra.mxu0 0.0
    %228 = vmatprep.subr.mxu0 0.0
    %229 = vmatpush1.msra.mxu0 0.0
    %230 = vmatprep.subr.mxu0 0.0
    %231 = vmatpush1.msra.mxu0 0.0
    %232 = vmatprep.subr.mxu0 0.0
    %233 = vmatpush1.msra.mxu0 0.0
    %234 = vmatprep.subr.mxu0 0.0
    %235 = vmatpush1.msra.mxu0 0.0
    %236 = vmatprep.subr.mxu0 0.0
    %237 = vmatpush1.msra.mxu0 0.0
    %238 = vmatprep.subr.mxu0 0.0
    %239 = vmatpush1.msra.mxu0 0.0
    %240 = vmatprep.subr.mxu0 0.0
    %241 = vmatpush1.msra.mxu0 0.0
    %242 = vmatprep.subr.mxu0 0.0
    %243 = vmatpush1.msra.mxu0 0.0
    %244 = vmatprep.subr.mxu0 0.0
    %245 = vmatpush1.msra.mxu0 0.0
    %246 = vmatprep.subr.mxu0 0.0
    %247 = vmatpush1.msra.mxu0 0.0
    %248 = vmatprep.subr.mxu0 0.0
    %249 = vmatpush1.msra.mxu0 0.0
    %250 = vmatprep.subr.mxu0 0.0
    %251 = vmatpush1.msra.mxu0 0.0
    %252 = vmatprep.subr.mxu0 0.0
    %253 = vmatpush1.msra.mxu0 0.0
    %254 = vmatprep.mubr.f32.mxu0 0.0
    %255 = vmatmul.mubr.f32.gmra.mrb[0].mxu0 %v143
    %v256 = vpop.f32.mrb[0].mxu0
    %v257 = vadd.f32 0.0, %v256
    %v258 = vpop.f32.mrb[0].mxu0
    %259 = vmatprep.mubr.f32.mxu0 0.0
    %260 = vmatmul.mubr.f32.gmra.mrb[0].mxu0 %v146
    %v261 = vpop.f32.mrb[0].mxu0
    %v262 = vadd.f32 0.0, %v261
    %v263 = vpop.f32.mrb[0].mxu0
    %264 = vmatprep.mubr.f32.mxu0 0.0
    %265 = vmatmul.mubr.f32.gmra.mrb[0].mxu0 %v149
    %v266 = vpop.f32.mrb[0].mxu0
    %v267 = vadd.f32 0.0, %v266
    %v268 = vpop.f32.mrb[0].mxu0
    %269 = vmatprep.mubr.f32.mxu0 0.0
    %270 = vmatmul.mubr.f32.gmra.mrb[0].mxu0 %v152
    %v271 = vpop.f32.mrb[0].mxu0
    %v272 = vadd.f32 0.0, %v271
    %v273 = vpop.f32.mrb[0].mxu0
    %274 = vmatprep.mubr.f32.mxu0 0.0
    %275 = vmatmul.mubr.f32.gmra.mrb[0].mxu0 %v155
    %v276 = vpop.f32.mrb[0].mxu0
    %v277 = vadd.f32 0.0, %v276
    %v278 = vpop.f32.mrb[0].mxu0
    %279 = vmatprep.mubr.f32.mxu0 0.0
    %280 = vmatmul.mubr.f32.gmra.mrb[0].mxu0 %v158
    %v281 = vpop.f32.mrb[0].mxu0
    %v282 = vadd.f32 0.0, %v281
    %v283 = vpop.f32.mrb[0].mxu0
    %284 = vmatprep.mubr.f32.mxu0 0.0
    %285 = vmatmul.mubr.f32.gmra.mrb[0].mxu0 %v161
    %v286 = vpop.f32.mrb[0].mxu0
    %v287 = vadd.f32 0.0, %v286
    %v288 = vpop.f32.mrb[0].mxu0
    %289 = vmatprep.mubr.f32.mxu0 0.0
    %290 = vmatmul.mubr.f32.gmra.mrb[0].mxu0 %v164
    %v291 = vpop.f32.mrb[0].mxu0
    %v292 = vadd.f32 0.0, %v291
    %v293 = vpop.f32.mrb[0].mxu0
    %294 = vmatprep.mubr.f32.mxu0 0.0
    %295 = vmatmul.mubr.f32.gmra.mrb[0].mxu0 %v167
    %v296 = vpop.f32.mrb[0].mxu0
    %v297 = vadd.f32 0.0, %v296
    %v298 = vpop.f32.mrb[0].mxu0
    %299 = vmatprep.mubr.f32.mxu0 0.0
    %300 = vmatmul.mubr.f32.gmra.mrb[0].mxu0 %v170
    %v301 = vpop.f32.mrb[0].mxu0
    %v302 = vadd.f32 0.0, %v301
    %v303 = vpop.f32.mrb[0].mxu0
    %304 = vmatprep.mubr.f32.mxu0 0.0
    %305 = vmatmul.mubr.f32.gmra.mrb[0].mxu0 %v173
    %v306 = vpop.f32.mrb[0].mxu0
    %v307 = vadd.f32 0.0, %v306
    %v308 = vpop.f32.mrb[0].mxu0
    %309 = vmatprep.mubr.f32.mxu0 0.0
    %310 = vmatmul.mubr.f32.gmra.mrb[0].mxu0 %v176
    %v311 = vpop.f32.mrb[0].mxu0
    %v312 = vadd.f32 0.0, %v311
    %v313 = vpop.f32.mrb[0].mxu0
    %314 = vmatprep.mubr.f32.mxu0 0.0
    %315 = vmatmul.mubr.f32.gmra.mrb[0].mxu0 %v179
    %v316 = vpop.f32.mrb[0].mxu0
    %v317 = vadd.f32 0.0, %v316
    %v318 = vpop.f32.mrb[0].mxu0
    %319 = vmatprep.mubr.f32.mxu0 0.0
    %320 = vmatmul.mubr.f32.gmra.mrb[0].mxu0 %v182
    %v321 = vpop.f32.mrb[0].mxu0
    %v322 = vadd.f32 0.0, %v321
    %v323 = vpop.f32.mrb[0].mxu0
    %324 = vmatprep.mubr.f32.mxu0 0.0
    %325 = vmatmul.mubr.f32.gmra.mrb[0].mxu0 %v185
    %v326 = vpop.f32.mrb[0].mxu0
    %v327 = vadd.f32 0.0, %v326
    %v328 = vpop.f32.mrb[0].mxu0
    %329 = vmatprep.mubr.f32.mxu0 0.0
    %330 = vmatmul.mubr.f32.gmra.mrb[0].mxu0 %v188
    %v331 = vpop.f32.mrb[0].mxu0
    %v332 = vadd.f32 0.0, %v331
    %v333 = vpop.f32.mrb[0].mxu0
    %334 = vdwg.mxu0
    %v335 = vld [vmem:[%s2] sm:$0x1]
    %v337 = vlaneseq
    %v338 = vshrl.u32 %v337, 7
    %v339 = vsub.s32 0, %v338
    %v340 = vrot.slane %v335, %v339
    %v342 = vmul.f32 %v257, %v340
    %v343 = vmul.f32 %v262, %v340
    %v344 = vmul.f32 %v267, %v340
    %v345 = vmul.f32 %v272, %v340
    %v346 = vmul.f32 %v277, %v340
    %v347 = vmul.f32 %v282, %v340
    %v348 = vmul.f32 %v287, %v340
    %v349 = vmul.f32 %v292, %v340
    %v350 = vmul.f32 %v297, %v340
    %v351 = vmul.f32 %v302, %v340
    %v352 = vmul.f32 %v307, %v340
    %v353 = vmul.f32 %v312, %v340
    %v354 = vmul.f32 %v317, %v340
    %v355 = vmul.f32 %v322, %v340
    %v356 = vmul.f32 %v327, %v340
    %v357 = vmul.f32 %v332, %v340
    %vm358 = vcmask 261120
    %v359 = vsel %vm358, %v342, 0.0
    %360 = vadd.xlane.f32.xlu0 %v359
    %v361 = vpop.xlane.xlu0 %360
    %v362 = vsel %vm358, %v343, 0.0
    %363 = vadd.xlane.f32.xlu0 %v362
    %v364 = vpop.xlane.xlu0 %363
    %v365 = vsel %vm358, %v344, 0.0
    %366 = vadd.xlane.f32.xlu0 %v365
    %v367 = vpop.xlane.xlu0 %366
    %v368 = vsel %vm358, %v345, 0.0
    %369 = vadd.xlane.f32.xlu0 %v368
    %v370 = vpop.xlane.xlu0 %369
    %v371 = vsel %vm358, %v346, 0.0
    %372 = vadd.xlane.f32.xlu0 %v371
    %v373 = vpop.xlane.xlu0 %372
    %v374 = vsel %vm358, %v347, 0.0
    %375 = vadd.xlane.f32.xlu0 %v374
    %v376 = vpop.xlane.xlu0 %375
    %v377 = vsel %vm358, %v348, 0.0
    %378 = vadd.xlane.f32.xlu0 %v377
    %v379 = vpop.xlane.xlu0 %378
    %v380 = vsel %vm358, %v349, 0.0
    %381 = vadd.xlane.f32.xlu0 %v380
    %v382 = vpop.xlane.xlu0 %381
    %v383 = vsel %vm358, %v350, 0.0
    %384 = vadd.xlane.f32.xlu0 %v383
    %v385 = vpop.xlane.xlu0 %384
    %v386 = vsel %vm358, %v351, 0.0
    %387 = vadd.xlane.f32.xlu0 %v386
    %v388 = vpop.xlane.xlu0 %387
    %v389 = vsel %vm358, %v352, 0.0
    %390 = vadd.xlane.f32.xlu0 %v389
    %v391 = vpop.xlane.xlu0 %390
    %v392 = vsel %vm358, %v353, 0.0
    %393 = vadd.xlane.f32.xlu0 %v392
    %v394 = vpop.xlane.xlu0 %393
    %v395 = vsel %vm358, %v354, 0.0
    %396 = vadd.xlane.f32.xlu0 %v395
    %v397 = vpop.xlane.xlu0 %396
    %v398 = vsel %vm358, %v355, 0.0
    %399 = vadd.xlane.f32.xlu0 %v398
    %v400 = vpop.xlane.xlu0 %399
    %v401 = vsel %vm358, %v356, 0.0
    %402 = vadd.xlane.f32.xlu0 %v401
    %v403 = vpop.xlane.xlu0 %402
    %v404 = vsel %vm358, %v357, 0.0
    %405 = vadd.xlane.f32.xlu0 %v404
    %v406 = vpop.xlane.xlu0 %405
    %s407 = sld [smem:[#allocation2]]
    %v408 = vstv %s407
    %v409 = vadd.f32 %v361, %v408
    %v410 = vadd.f32 %v364, %v408
    %v411 = vadd.f32 %v367, %v408
    %v412 = vadd.f32 %v370, %v408
    %v413 = vadd.f32 %v373, %v408
    %v414 = vadd.f32 %v376, %v408
    %v415 = vadd.f32 %v379, %v408
    %v416 = vadd.f32 %v382, %v408
    %v417 = vadd.f32 %v385, %v408
    %v418 = vadd.f32 %v388, %v408
    %v419 = vadd.f32 %v391, %v408
    %v420 = vadd.f32 %v394, %v408
    %v421 = vadd.f32 %v397, %v408
    %v422 = vadd.f32 %v400, %v408
    %v423 = vadd.f32 %v403, %v408
    %v424 = vadd.f32 %v406, %v408
    %v425 = vxor.u32 %v409, 2147483648
    %v426 = vxor.u32 %v410, 2147483648
    %v427 = vxor.u32 %v411, 2147483648
    %v428 = vxor.u32 %v412, 2147483648
    %v429 = vxor.u32 %v413, 2147483648
    %v430 = vxor.u32 %v414, 2147483648
    %v431 = vxor.u32 %v415, 2147483648
    %v432 = vxor.u32 %v416, 2147483648
    %v433 = vxor.u32 %v417, 2147483648
    %v434 = vxor.u32 %v418, 2147483648
    %v435 = vxor.u32 %v419, 2147483648
    %v436 = vxor.u32 %v420, 2147483648
    %v437 = vxor.u32 %v421, 2147483648
    %v438 = vxor.u32 %v422, 2147483648
    %v439 = vxor.u32 %v423, 2147483648
    %v440 = vxor.u32 %v424, 2147483648
    %v441 = vmul.f32 %v425, 1.442695
    %v442 = vpow.pop %v441
    %v443 = vmul.f32 %v426, 1.442695
    %v444 = vpow.pop %v443
    %v445 = vmul.f32 %v427, 1.442695
    %v446 = vpow.pop %v445
    %v447 = vmul.f32 %v428, 1.442695
    %v448 = vpow.pop %v447
    %v449 = vmul.f32 %v429, 1.442695
    %v450 = vpow.pop %v449
    %v451 = vmul.f32 %v430, 1.442695
    %v452 = vpow.pop %v451
    %v453 = vmul.f32 %v431, 1.442695
    %v454 = vpow.pop %v453
    %v455 = vmul.f32 %v432, 1.442695
    %v456 = vpow.pop %v455
    %v457 = vmul.f32 %v433, 1.442695
    %v458 = vpow.pop %v457
    %v459 = vmul.f32 %v434, 1.442695
    %v460 = vpow.pop %v459
    %v461 = vmul.f32 %v435, 1.442695
    %v462 = vpow.pop %v461
    %v463 = vmul.f32 %v436, 1.442695
    %v464 = vpow.pop %v463
    %v465 = vmul.f32 %v437, 1.442695
    %v466 = vpow.pop %v465
    %v467 = vmul.f32 %v438, 1.442695
    %v468 = vpow.pop %v467
    %v469 = vmul.f32 %v439, 1.442695
    %v470 = vpow.pop %v469
    %v471 = vmul.f32 %v440, 1.442695
    %v472 = vpow.pop %v471
    %v473 = vadd.f32 %v442, 1.0
    %v474 = vadd.f32 %v444, 1.0
    %v475 = vadd.f32 %v446, 1.0
    %v476 = vadd.f32 %v448, 1.0
    %v477 = vadd.f32 %v450, 1.0
    %v478 = vadd.f32 %v452, 1.0
    %v479 = vadd.f32 %v454, 1.0
    %v480 = vadd.f32 %v456, 1.0
    %v481 = vadd.f32 %v458, 1.0
    %v482 = vadd.f32 %v460, 1.0
    %v483 = vadd.f32 %v462, 1.0
    %v484 = vadd.f32 %v464, 1.0
    %v485 = vadd.f32 %v466, 1.0
    %v486 = vadd.f32 %v468, 1.0
    %v487 = vadd.f32 %v470, 1.0
    %v488 = vadd.f32 %v472, 1.0
    %v489 = vrcp.pop %v473
    %v490 = vmul.f32 1.0, %v489
    %v491 = vrcp.pop %v474
    %v492 = vmul.f32 1.0, %v491
    %v493 = vrcp.pop %v475
    %v494 = vmul.f32 1.0, %v493
    %v495 = vrcp.pop %v476
    %v496 = vmul.f32 1.0, %v495
    %v497 = vrcp.pop %v477
    %v498 = vmul.f32 1.0, %v497
    %v499 = vrcp.pop %v478
    %v500 = vmul.f32 1.0, %v499
    %v501 = vrcp.pop %v479
    %v502 = vmul.f32 1.0, %v501
    %v503 = vrcp.pop %v480
    %v504 = vmul.f32 1.0, %v503
    %v505 = vrcp.pop %v481
    %v506 = vmul.f32 1.0, %v505
    %v507 = vrcp.pop %v482
    %v508 = vmul.f32 1.0, %v507
    %v509 = vrcp.pop %v483
    %v510 = vmul.f32 1.0, %v509
    %v511 = vrcp.pop %v484
    %v512 = vmul.f32 1.0, %v511
    %v513 = vrcp.pop %v485
    %v514 = vmul.f32 1.0, %v513
    %v515 = vrcp.pop %v486
    %v516 = vmul.f32 1.0, %v515
    %v517 = vrcp.pop %v487
    %v518 = vmul.f32 1.0, %v517
    %v519 = vrcp.pop %v488
    %v520 = vmul.f32 1.0, %v519
    %521 = vxpose.xlu0.b32.start [1/16] %v490, 128
    %522 = vxpose.xlu0.b32.cont [2/16] %v492, 128
    %523 = vxpose.xlu0.b32.cont [3/16] %v494, 128
    %524 = vxpose.xlu0.b32.cont [4/16] %v496, 128
    %525 = vxpose.xlu0.b32.cont [5/16] %v498, 128
    %526 = vxpose.xlu0.b32.cont [6/16] %v500, 128
    %527 = vxpose.xlu0.b32.cont [7/16] %v502, 128
    %528 = vxpose.xlu0.b32.cont [8/16] %v504, 128
    %529 = vxpose.xlu0.b32.cont [9/16] %v506, 128
    %530 = vxpose.xlu0.b32.cont [10/16] %v508, 128
    %531 = vxpose.xlu0.b32.cont [11/16] %v510, 128
    %532 = vxpose.xlu0.b32.cont [12/16] %v512, 128
    %533 = vxpose.xlu0.b32.cont [13/16] %v514, 128
    %534 = vxpose.xlu0.b32.cont [14/16] %v516, 128
    %535 = vxpose.xlu0.b32.cont [15/16] %v518, 128
    %536 = vxpose.xlu0.b32.end [16/16] %v520, 128
    %v537 = vpop.trf.xlu0
    %v538 = vpop.trf.xlu0
    %v539 = vpop.trf.xlu0
    %v540 = vpop.trf.xlu0
    %v541 = vpop.trf.xlu0
    %v542 = vpop.trf.xlu0
    %v543 = vpop.trf.xlu0
    %v544 = vpop.trf.xlu0
    %v545 = vpop.trf.xlu0
    %v546 = vpop.trf.xlu0
    %v547 = vpop.trf.xlu0
    %v548 = vpop.trf.xlu0
    %v549 = vpop.trf.xlu0
    %v550 = vpop.trf.xlu0
    %v551 = vpop.trf.xlu0
    %v552 = vpop.trf.xlu0
    %553 = vst [vmem:[#allocation3] sm:$0x1] %v537
    // Predicated region
    $region18: #{tpu_custom_call.1} parent=1 // pred_check
      _
    $region19: #{tpu_custom_call.1} parent=1 // pred_check_branch
      %555 = sbr.rel (0) target = $region21
    $region20: #{tpu_custom_call.1} parent=1 // pred_region
      %s557 = ssub.s32 16, 16
      %558 = vsyncadd [#allocation4], %s557
      %s560 = sshll.u32 [#allocation3], 4
      %s561 = int_to_ptr.vmem [resolvable:$true] %s560
      %563 = dma.vmem_to_hbm [thread:$0]  %s561, 16, %s4, [#allocation4]
    $region21: #{tpu_custom_call.1} parent=1 // pred_fallthru
      _
    // Predicated region
    $region22: #{tpu_custom_call.1} parent=1 // pred_check
      _
    $region23: #{tpu_custom_call.1} parent=1 // pred_check_branch
      %565 = sbr.rel (0) target = $region25
    $region24: #{tpu_custom_call.1} parent=1 // pred_region
      %566 = dma.done [#allocation4], 16
    $region25: #{tpu_custom_call.1} parent=1 // pred_fallthru
      _
    %567 = vsyncpa [#allocation4], 1

</llo_original>
